<compile_context>
chip_gen: v6e
topology: v6e:2x2x1
jax: 0.10.0
libtpu: 0.0.40
codegen_flags: <defaults>
</compile_context>

<pallas_src>
import math

import jax
import jax.numpy as jnp
from jax.experimental import pallas as pl
from jax.experimental.pallas import tpu as pltpu

LN_EPS = 1e-6          # ViT uses LayerNorm(eps=1e-6)
LANE = 128             # TPU lane width
_VMEM_LIMIT = 48 * 1024 * 1024   # explicit scoped-VMEM budget (fits all of v5e/v6e/v7x)


def _round_up(x, m):
    return ((x + m - 1) // m) * m


# ----------------------------- shared math helpers -----------------------------

def _layernorm(x, w, b):
    mu = jnp.mean(x, axis=-1, keepdims=True)
    var = jnp.mean((x - mu) ** 2, axis=-1, keepdims=True)
    return (x - mu) * jax.lax.rsqrt(var + LN_EPS) * w + b


def _erf_poly(x):
    # Abramowitz & Stegun 7.1.26 polynomial erf approximation (|err| <= 1.5e-7),
    # keeps exact (erf-based) GELU semantics without relying on an erf lowering.
    a1, a2, a3, a4, a5 = 0.254829592, -0.284496736, 1.421413741, -1.453152027, 1.061405429
    p = 0.3275911
    s = jnp.sign(x)
    ax = jnp.abs(x)
    t = 1.0 / (1.0 + p * ax)
    poly = ((((a5 * t + a4) * t + a3) * t + a2) * t + a1) * t
    return s * (1.0 - poly * jnp.exp(-ax * ax))


def _gelu_exact_kernel(x):
    # PyTorch F.gelu default: 0.5 * x * (1 + erf(x / sqrt(2)))
    return 0.5 * x * (1.0 + _erf_poly(x * (1.0 / math.sqrt(2.0))))


# --------------------------------- Pallas kernels --------------------------------

def embed_kernel(patch_ref, w_ref, b_ref, cls_ref, pos_ref, out_ref):
    # patch_ref: (1, Sp, Dp) bf16  (row 0 zeroed = cls slot, rows >= S zero-padded)
    # w_ref: (Dp, H) bf16   b_ref/cls_ref: (1, H) f32   pos_ref: (Sp, H) f32
    # out_ref: (1, Sp, H) f32
    emb = jnp.dot(patch_ref[0], w_ref[...],
                  preferred_element_type=jnp.float32) + b_ref[...]        # (Sp, H) f32
    row = jax.lax.broadcasted_iota(jnp.int32, (emb.shape[0], 1), 0)
    full = jnp.where(row == 0, cls_ref[...], emb)                         # cls token at row 0
    out_ref[0] = full + pos_ref[...]                                      # single dense store


def make_layer_kernel(num_heads, head_dim, seq_len):
    scale = 1.0 / math.sqrt(head_dim)

    def layer_kernel(h_ref, anw_ref, anb_ref, qw_ref, qb_ref, kw_ref, kb_ref,
                     vw_ref, vb_ref, ow_ref, ob_ref, fnw_ref, fnb_ref,
                     f1w_ref, f1b_ref, f2w_ref, f2b_ref,
                     out_ref, attn_ref):
        x = h_ref[0]                                                      # (Sp, H) f32
        Sp, H = x.shape

        # --- self attention (pre-norm) ---
        xn = _layernorm(x, anw_ref[...], anb_ref[...]).astype(jnp.bfloat16)
        # bf16 MXU matmuls, f32 accumulation.  Softmax scale folded into q.
        q = ((jnp.dot(xn, qw_ref[...], preferred_element_type=jnp.float32)
              + qb_ref[...]) * scale).astype(jnp.bfloat16)
        k = (jnp.dot(xn, kw_ref[...], preferred_element_type=jnp.float32)
             + kb_ref[...]).astype(jnp.bfloat16)
        v = (jnp.dot(xn, vw_ref[...], preferred_element_type=jnp.float32)
             + vb_ref[...]).astype(jnp.bfloat16)

        def heads(t):                                                     # (Sp, H) -> (nh, Sp, hd)
            return jnp.transpose(t.reshape(Sp, num_heads, head_dim), (1, 0, 2))

        qh, kh, vh = heads(q), heads(k), heads(v)

        # Batched scores contracting head_dim directly (no explicit k transpose).
        s = jax.lax.dot_general(qh, kh, (((2,), (2,)), ((0,), (0,))),
                                preferred_element_type=jnp.float32)       # (nh, Sp, Sp)
        # Mask padded key columns so they get exactly zero probability.
        col = jax.lax.broadcasted_iota(jnp.int32, s.shape, 2)
        s = jnp.where(col < seq_len, s, -1e30)
        s = s - jnp.max(s, axis=-1, keepdims=True)
        e = jnp.exp(s)
        denom = jnp.sum(e, axis=-1, keepdims=True)
        p = e * pl.reciprocal(denom, approx=True)                         # EUP reciprocal
        attn_ref[0] = p                                                   # lane-dense (nh,Sp,Sp)

        ctx = jax.lax.dot_general(p.astype(jnp.bfloat16), vh,
                                  (((2,), (1,)), ((0,), (0,))),
                                  preferred_element_type=jnp.float32)     # (nh, Sp, hd)
        ctx = jnp.transpose(ctx, (1, 0, 2)).reshape(Sp, H).astype(jnp.bfloat16)
        # Single fused output projection (K = H) instead of per-head K = head_dim.
        attn_out = jnp.dot(ctx, ow_ref[...],
                           preferred_element_type=jnp.float32) + ob_ref[...]
        x1 = x + attn_out                                                 # residual

        # --- MLP (pre-norm) ---
        xn2 = _layernorm(x1, fnw_ref[...], fnb_ref[...]).astype(jnp.bfloat16)
        h1 = _gelu_exact_kernel(
            jnp.dot(xn2, f1w_ref[...], preferred_element_type=jnp.float32) + f1b_ref[...])
        h2 = jnp.dot(h1.astype(jnp.bfloat16), f2w_ref[...],
                     preferred_element_type=jnp.float32) + f2b_ref[...]
        out_ref[0] = x1 + h2                                              # residual

    return layer_kernel


def final_norm_kernel(h_ref, w_ref, b_ref, out_ref):
    out_ref[0] = _layernorm(h_ref[0], w_ref[...], b_ref[...])


# --------------------------------- pallas wrappers --------------------------------

def pallas_patch_embed(patches_pad, w, b, cls, pos_pad):
    B, Pp, Dp = patches_pad.shape
    Sp, H = pos_pad.shape
    return pl.pallas_call(
        embed_kernel,
        out_shape=jax.ShapeDtypeStruct((B, Sp, H), jnp.float32),
        grid=(B,),
        in_specs=[
            pl.BlockSpec((1, Pp, Dp), lambda i: (i, 0, 0)),
            pl.BlockSpec((Dp, H), lambda i: (0, 0)),
            pl.BlockSpec((1, H), lambda i: (0, 0)),
            pl.BlockSpec((1, H), lambda i: (0, 0)),
            pl.BlockSpec((Sp, H), lambda i: (0, 0)),
        ],
        out_specs=pl.BlockSpec((1, Sp, H), lambda i: (i, 0, 0)),
        compiler_params=pltpu.CompilerParams(
            dimension_semantics=("parallel",), vmem_limit_bytes=_VMEM_LIMIT),
    )(patches_pad, w, b, cls, pos_pad)


_LAYER_PARAM_ORDER = ["anw", "anb", "qw", "qb", "kw", "kb", "vw", "vb",
                      "ow", "ob", "fnw", "fnb", "f1w", "f1b", "f2w", "f2b"]
_MATMUL_WEIGHTS = {"qw", "kw", "vw", "ow", "f1w", "f2w"}   # cast to bf16 once per call


def pallas_layer(h, lp, num_heads, seq_len):
    B, Sp, H = h.shape
    kernel = make_layer_kernel(num_heads, H // num_heads, seq_len)
    params = [lp[n] for n in _LAYER_PARAM_ORDER]

    def full_spec(a):
        nd = a.ndim
        return pl.BlockSpec(a.shape, lambda i, _nd=nd: (0,) * _nd)

    in_specs = [pl.BlockSpec((1, Sp, H), lambda i: (i, 0, 0))] + [full_spec(a) for a in params]
    out_specs = (pl.BlockSpec((1, Sp, H), lambda i: (i, 0, 0)),
                 pl.BlockSpec((1, num_heads, Sp, Sp), lambda i: (i, 0, 0, 0)))
    out_shape = (jax.ShapeDtypeStruct((B, Sp, H), jnp.float32),
                 jax.ShapeDtypeStruct((B, num_heads, Sp, Sp), jnp.float32))
    return pl.pallas_call(
        kernel,
        out_shape=out_shape,
        grid=(B,),
        in_specs=in_specs,
        out_specs=out_specs,
        compiler_params=pltpu.CompilerParams(
            dimension_semantics=("parallel",), vmem_limit_bytes=_VMEM_LIMIT),
    )(h, *params)


def pallas_final_norm(h, w, b):
    B, Sp, H = h.shape
    return pl.pallas_call(
        final_norm_kernel,
        out_shape=jax.ShapeDtypeStruct((B, Sp, H), jnp.float32),
        grid=(B,),
        in_specs=[
            pl.BlockSpec((1, Sp, H), lambda i: (i, 0, 0)),
            pl.BlockSpec((1, H), lambda i: (0, 0)),
            pl.BlockSpec((1, H), lambda i: (0, 0)),
        ],
        out_specs=pl.BlockSpec((1, Sp, H), lambda i: (i, 0, 0)),
        compiler_params=pltpu.CompilerParams(
            dimension_semantics=("parallel",), vmem_limit_bytes=_VMEM_LIMIT),
    )(h, w, b)


# ------------------------------------- glue ---------------------------------------

def extract_patches(x, patch):
    # x: (B, C, H, W)  ->  (B, n_patches, C*patch*patch), flattened in (C, ph, pw)
    # order so it matches the flattened Conv2d(kernel=stride=patch) weight.
    B, C, Hh, Ww = x.shape
    nh, nw = Hh // patch, Ww // patch
    p = x.reshape(B, C, nh, patch, nw, patch)
    p = p.transpose(0, 2, 4, 1, 3, 5)
    return p.reshape(B, nh * nw, C * patch * patch)


def visual_attention_forward(x, params, cfg):
    # Mirrors VisualAttentionModel.forward: embeddings -> per-layer block (collect
    # attention probs) -> encoder_norm.  Dropout layers are eval-mode identities.
    H = cfg["hidden"]
    patches = extract_patches(x, cfg["patch"])                 # (B, P, Dp)
    B, P, Dp = patches.shape
    S = P + 1
    Sp = _round_up(S, LANE)                                    # lane-dense padded seq

    # Pad: row 0 is the cls slot (zeros), rows >= S are zero padding.
    patches_pad = jnp.pad(patches, ((0, 0), (1, Sp - 1 - P), (0, 0))).astype(jnp.bfloat16)
    pos_pad = jnp.pad(params["pos"], ((0, Sp - S), (0, 0)))

    h = pallas_patch_embed(patches_pad, params["patch_w"].astype(jnp.bfloat16),
                           params["patch_b"], params["cls"], pos_pad)

    attn_all = []
    for lp in params["layers"]:
        lp_cast = {k: (v.astype(jnp.bfloat16) if k in _MATMUL_WEIGHTS else v)
                   for k, v in lp.items()}
        h, w = pallas_layer(h, lp_cast, cfg["heads"], S)
        attn_all.append(w[:, :, :S, :S])                       # drop padded rows/cols
    encoded = pallas_final_norm(h, params["enw"], params["enb"])[:, :S, :]
    return encoded, attn_all


# ------------------------------ pure-JAX reference ---------------------------------

def reference_forward(x, params, cfg):
    B = x.shape[0]
    H, nh = cfg["hidden"], cfg["heads"]
    hd = H // nh
    patches = extract_patches(x, cfg["patch"])
    emb = patches @ params["patch_w"] + params["patch_b"]
    cls = jnp.broadcast_to(params["cls"][None], (B, 1, H))
    h = jnp.concatenate([cls, emb], axis=1) + params["pos"][None]
    attn_all = []
    for lp in params["layers"]:
        xn = _layernorm(h, lp["anw"], lp["anb"])
        q = xn @ lp["qw"] + lp["qb"]
        k = xn @ lp["kw"] + lp["kb"]
        v = xn @ lp["vw"] + lp["vb"]

        def split(t):
            return t.reshape(B, -1, nh, hd).transpose(0, 2, 1, 3)

        qh, kh, vh = split(q), split(k), split(v)
        scores = jnp.einsum("bhqd,bhkd->bhqk", qh, kh) / math.sqrt(hd)
        probs = jax.nn.softmax(scores, axis=-1)
        attn_all.append(probs)
        ctx = jnp.einsum("bhqk,bhkd->bhqd", probs, vh).transpose(0, 2, 1, 3).reshape(h.shape)
        x1 = h + ctx @ lp["ow"] + lp["ob"]
        xn2 = _layernorm(x1, lp["fnw"], lp["fnb"])
        hid = xn2 @ lp["f1w"] + lp["f1b"]
        hid = 0.5 * hid * (1.0 + jax.lax.erf(hid / math.sqrt(2.0)))  # exact GELU
        h = x1 + hid @ lp["f2w"] + lp["f2b"]
    encoded = _layernorm(h, params["enw"], params["enb"])
    return encoded, attn_all


# ------------------------------------ params ---------------------------------------

def init_params(key, cfg):
    C, P, H, M, L = cfg["chans"], cfg["patch"], cfg["hidden"], cfg["mlp"], cfg["layers"]
    n_patches = (cfg["img"] // P) ** 2
    S = n_patches + 1
    std = 0.02
    keys = jax.random.split(key, 6 + L)

    conv_w = std * jax.random.normal(keys[0], (H, C, P, P), jnp.float32)  # Conv2d weight
    params = dict(
        patch_w=conv_w.reshape(H, C * P * P).T,          # (C*P*P, H)
        patch_b=jnp.zeros((1, H), jnp.float32),
        cls=std * jax.random.normal(keys[1], (1, H), jnp.float32),
        pos=std * jax.random.normal(keys[2], (S, H), jnp.float32),
        enw=1.0 + 0.1 * jax.random.normal(keys[3], (1, H), jnp.float32),
        enb=0.1 * jax.random.normal(keys[4], (1, H), jnp.float32),
        layers=[],
    )
    for li in range(L):
        lk = jax.random.split(keys[6 + li], 12)
        lp = dict(
            anw=1.0 + 0.1 * jax.random.normal(lk[0], (1, H), jnp.float32),
            anb=0.1 * jax.random.normal(lk[1], (1, H), jnp.float32),
            qw=std * jax.random.normal(lk[2], (H, H), jnp.float32),
            qb=0.1 * std * jax.random.normal(lk[3], (1, H), jnp.float32),
            kw=std * jax.random.normal(lk[4], (H, H), jnp.float32),
            kb=jnp.zeros((1, H), jnp.float32),
            vw=std * jax.random.normal(lk[5], (H, H), jnp.float32),
            vb=jnp.zeros((1, H), jnp.float32),
            ow=std * jax.random.normal(lk[6], (H, H), jnp.float32),
            ob=jnp.zeros((1, H), jnp.float32),
            fnw=1.0 + 0.1 * jax.random.normal(lk[7], (1, H), jnp.float32),
            fnb=0.1 * jax.random.normal(lk[8], (1, H), jnp.float32),
            f1w=std * jax.random.normal(lk[9], (H, M), jnp.float32),
            f1b=jnp.zeros((1, M), jnp.float32),
            f2w=std * jax.random.normal(lk[10], (M, H), jnp.float32),
            f2b=jnp.zeros((1, H), jnp.float32),
        )
        params["layers"].append(lp)
    return params


# -------------------------------------- main ----------------------------------------

if __name__ == "__main__":
    cfg = dict(batch=2, chans=4, img=16, patch=8, hidden=32, heads=4, mlp=64, layers=2)
    key = jax.random.PRNGKey(0)
    kx, kp = jax.random.split(key)
    x = jax.random.normal(kx, (cfg["batch"], cfg["chans"], cfg["img"], cfg["img"]),
                          jnp.float32)
    params = init_params(kp, cfg)

    encoded, attn_layers = visual_attention_forward(x, params, cfg)
    encoded = jax.block_until_ready(encoded)
    attn_layers = [jax.block_until_ready(a) for a in attn_layers]

    enc_ref, attn_ref = reference_forward(x, params, cfg)
    # bf16 matmul inputs (f32 accumulation) + erf-poly GELU + approx reciprocal
    # introduce small, expected deviations vs the pure-f32 reference.
    assert bool(jnp.allclose(encoded, enc_ref, atol=2e-2, rtol=2e-2)), "encoded mismatch"
    for a, r in zip(attn_layers, attn_ref):
        assert a.shape == r.shape
        assert bool(jnp.allclose(a, r, atol=2e-2, rtol=2e-2)), "attention mismatch"

    print("KERNEL_OK")
</pallas_src>

<mosaic_0001>
module attributes {stable_mosaic.version = 11 : i64} {
  func.func @embed_kernel(%arg0: i32, %arg1: memref<1x128x256xbf16, #tpu.memory_space<vmem>>, %arg2: memref<256x32xbf16, #tpu.memory_space<vmem>>, %arg3: memref<1x32xf32, #tpu.memory_space<vmem>>, %arg4: memref<1x32xf32, #tpu.memory_space<vmem>>, %arg5: memref<128x32xf32, #tpu.memory_space<vmem>>, %arg6: memref<1x128x32xf32, #tpu.memory_space<vmem>>) attributes {dimension_semantics = [#tpu.dimension_semantics<parallel>], iteration_bounds = array<i64: 2>, scalar_prefetch = 0 : i64, scratch_operands = 0 : i64, tpu.core_type = #tpu.core_type<tc>, window_params = [{transform_indices = @transform_0, window_bounds = array<i64: 1, 128, 256>}, {pipeline_mode = #tpu.pipeline_mode<synchronous>, transform_indices = @transform_1, window_bounds = array<i64: 256, 32>}, {pipeline_mode = #tpu.pipeline_mode<synchronous>, transform_indices = @transform_2, window_bounds = array<i64: 1, 32>}, {pipeline_mode = #tpu.pipeline_mode<synchronous>, transform_indices = @transform_3, window_bounds = array<i64: 1, 32>}, {pipeline_mode = #tpu.pipeline_mode<synchronous>, transform_indices = @transform_4, window_bounds = array<i64: 128, 32>}, {transform_indices = @transform_5, window_bounds = array<i64: 1, 128, 32>}]} {
    %c0 = arith.constant 0 : index
    %c0_0 = arith.constant 0 : index
    %c0_1 = arith.constant 0 : index
    %0 = vector.load %arg1[%c0, %c0_0, %c0_1] : memref<1x128x256xbf16, #tpu.memory_space<vmem>>, vector<1x128x256xbf16>
    %1 = vector.shape_cast %0 : vector<1x128x256xbf16> to vector<128x256xbf16>
    %c0_2 = arith.constant 0 : index
    %c0_3 = arith.constant 0 : index
    %2 = vector.load %arg2[%c0_2, %c0_3] : memref<256x32xbf16, #tpu.memory_space<vmem>>, vector<256x32xbf16>
    %cst = arith.constant dense<0.000000e+00> : vector<128x32xf32>
    %3 = tpu.matmul %1, %2, %cst {dimension_numbers = #tpu.dot_dimension_numbers<[1], [0], [0], [1], [0, 0, 1, 1], [], []>} : vector<128x256xbf16>, vector<256x32xbf16>, vector<128x32xf32> -> vector<128x32xf32>
    %c0_4 = arith.constant 0 : index
    %c0_5 = arith.constant 0 : index
    %4 = vector.load %arg3[%c0_4, %c0_5] : memref<1x32xf32, #tpu.memory_space<vmem>>, vector<1x32xf32>
    %5 = vector.broadcast %4 : vector<1x32xf32> to vector<128x32xf32>
    %6 = arith.addf %3, %5 : vector<128x32xf32>
    %7 = tpu.iota {dimensions = array<i32: 0>} : vector<128x1xi32>
    %c0_i32 = arith.constant 0 : i32
    %8 = vector.broadcast %c0_i32 : i32 to vector<128x1xi32>
    %9 = arith.cmpi eq, %7, %8 : vector<128x1xi32>
    %c0_6 = arith.constant 0 : index
    %c0_7 = arith.constant 0 : index
    %10 = vector.load %arg4[%c0_6, %c0_7] : memref<1x32xf32, #tpu.memory_space<vmem>>, vector<1x32xf32>
    %11 = vector.shape_cast %9 : vector<128x1xi1> to vector<128x1xi1>
    %12 = vector.broadcast %11 : vector<128x1xi1> to vector<128x32xi1>
    %13 = vector.shape_cast %10 : vector<1x32xf32> to vector<1x32xf32>
    %14 = vector.broadcast %13 : vector<1x32xf32> to vector<128x32xf32>
    %15 = arith.select %12, %14, %6 : vector<128x32xi1>, vector<128x32xf32>
    %c0_8 = arith.constant 0 : index
    %c0_9 = arith.constant 0 : index
    %16 = vector.load %arg5[%c0_8, %c0_9] : memref<128x32xf32, #tpu.memory_space<vmem>>, vector<128x32xf32>
    %17 = arith.addf %15, %16 : vector<128x32xf32>
    %c0_10 = arith.constant 0 : index
    %c0_11 = arith.constant 0 : index
    %c0_12 = arith.constant 0 : index
    %18 = vector.load %arg6[%c0_10, %c0_11, %c0_12] : memref<1x128x32xf32, #tpu.memory_space<vmem>>, vector<1x128x32xf32>
    %19 = vector.shape_cast %18 : vector<1x128x32xf32> to vector<128x32xf32>
    %20 = vector.shape_cast %17 : vector<128x32xf32> to vector<1x128x32xf32>
    tpu.vector_store %arg6[%c0_10, %c0_11, %c0_12], %20 {strides = array<i32>} : memref<1x128x32xf32, #tpu.memory_space<vmem>>, vector<1x128x32xf32>,
    return
  }
  func.func @transform_0(%arg0: i32) -> (i32, i32, i32) {
    %c0_i32 = arith.constant 0 : i32
    %c0_i32_0 = arith.constant 0 : i32
    %c0_i32_1 = arith.constant 0 : i32
    return %arg0, %c0_i32, %c0_i32_0 : i32, i32, i32
  }
  func.func @transform_1(%arg0: i32) -> (i32, i32) {
    %c0_i32 = arith.constant 0 : i32
    %c0_i32_0 = arith.constant 0 : i32
    %c0_i32_1 = arith.constant 0 : i32
    return %c0_i32, %c0_i32_0 : i32, i32
  }
  func.func @transform_2(%arg0: i32) -> (i32, i32) {
    %c0_i32 = arith.constant 0 : i32
    %c0_i32_0 = arith.constant 0 : i32
    %c0_i32_1 = arith.constant 0 : i32
    return %c0_i32, %c0_i32_0 : i32, i32
  }
  func.func @transform_3(%arg0: i32) -> (i32, i32) {
    %c0_i32 = arith.constant 0 : i32
    %c0_i32_0 = arith.constant 0 : i32
    %c0_i32_1 = arith.constant 0 : i32
    return %c0_i32, %c0_i32_0 : i32, i32
  }
  func.func @transform_4(%arg0: i32) -> (i32, i32) {
    %c0_i32 = arith.constant 0 : i32
    %c0_i32_0 = arith.constant 0 : i32
    %c0_i32_1 = arith.constant 0 : i32
    return %c0_i32, %c0_i32_0 : i32, i32
  }
  func.func @transform_5(%arg0: i32) -> (i32, i32, i32) {
    %c0_i32 = arith.constant 0 : i32
    %c0_i32_0 = arith.constant 0 : i32
    %c0_i32_1 = arith.constant 0 : i32
    return %arg0, %c0_i32, %c0_i32_0 : i32, i32, i32
  }
}

</mosaic_0001>

<llo_original>
// kernel: tpu_custom_call.1
$region0: #{tpu_custom_call.1}
  #allocation0 [shape = 'u32[]', space=smem, size = 0x4, offset = 0x4, fixed_abs, tag = 'smem constant byte address 0x4 - core index']
  #allocation1 [shape = 'u32[144,128]{1,0:T(1,128)}', space=vmem, size = 0x12000, scoped, tag = 'internal scratch']
  %s0 = inlined_call_operand.vmem [shape: bf16[2,128,256], index: 0, kind: input, shape index: {}]
  %s1 = inlined_call_operand.vmem [shape: bf16[256,32], index: 1, kind: input, shape index: {}]
  %s2 = inlined_call_operand.vmem [shape: f32[1,32], index: 2, kind: input, shape index: {}]
  %s3 = inlined_call_operand.vmem [shape: f32[1,32], index: 3, kind: input, shape index: {}]
  %s4 = inlined_call_operand.vmem [shape: f32[128,32], index: 4, kind: input, shape index: {}]
  %s5 = inlined_call_operand.vmem [shape: f32[2,128,32], index: 5, kind: output, shape index: {}]
  %s6 = sld [smem:[#allocation0]]
  $region53: #{tpu_custom_call.1} parent=0
    _
  %s8 = ssub.s32 1, %s6
  %s9 = scalar_select 0, %s8, %s6
  loop: start=0, step=1, limit=4
  $region2: #{tpu_custom_call.1} parent=0 // loop_pre_header
    _
  $region3: #{tpu_custom_call.1} parent=0 // loop_header
    %s11 = sphi 0, %s15
    %p12 = scmp.ge.s32.totalorder %s11, 4
    %s21 = sphi 0, %s23
    %s24 = sphi 0, %s21
    %s25 = sphi 0, %s24
    %s41 = sphi 0, %s25
    %s45 = sphi 0, %s45
    %s47 = sphi 0, %s45
    %s48 = sphi 0, %s47
    %s62 = sphi 0, %s48
    %s66 = sphi 0, %s66
    %s68 = sphi 0, %s66
    %s69 = sphi 0, %s68
    %s83 = sphi 0, %s69
    %s87 = sphi 0, %s87
    %s89 = sphi 0, %s87
    %s90 = sphi 0, %s89
    %s104 = sphi 0, %s90
    %s108 = sphi 0, %s108
    %s110 = sphi 0, %s108
    %s111 = sphi 0, %s110
    %s125 = sphi 0, %s111
    %s131 = sphi 0, %s133
    %s134 = sphi 0, %s131
    %s135 = sphi 0, %s134
    %s151 = sphi 0, %s135
  $region4: #{tpu_custom_call.1} parent=0 // loop_header_branch
    %14 = sbr.rel (%p12) target = $region8
  $region5: #{tpu_custom_call.1} parent=0 // loop_body
    %s16 = ssub.s32 %s11, 1
    %s17 = ssub.s32 %s11, 2
    %s18 = sadd.s32 %s11, 1
    %s19 = ssub.s32 %s11, %s18
    %p20 = scmp.eq.s32.totalorder %s19, 0
    %s22 = sadd.s32 %s21, 1
    %s23 = scalar_select %p20, %s21, %s22
    %p26 = pneg %p20
    %p27 = scmp.eq.s32.totalorder %s11, 1
    %p28 = por %p26, %p27
    %p29 = scmp.ne.s32.totalorder %s21, %s24
    %p30 = scmp.eq.s32.totalorder %s11, 0
    %p31 = por %p29, %p30
    %p32 = scmp.ne.s32.totalorder %s21, %s24
    %p33 = scmp.eq.s32.totalorder %s16, 1
    %p34 = por %p32, %p33
    %p35 = scmp.ne.s32.totalorder %s24, %s25
    %p36 = scmp.eq.s32.totalorder %s16, 0
    %p37 = por %p35, %p36
    %p38 = scmp.ne.s32.totalorder %s24, %s25
    %p39 = scmp.eq.s32.totalorder %s17, 1
    %p40 = por %p38, %p39
    %p42 = scmp.ne.s32.totalorder %s25, %s41
    %p43 = scmp.eq.s32.totalorder %s17, 0
    %p44 = por %p42, %p43
    %s46 = sadd.s32 %s45, 1
    %p49 = scmp.eq.s32.totalorder %s11, 1
    %p50 = scmp.ne.s32.totalorder %s45, %s47
    %p51 = scmp.eq.s32.totalorder %s11, 0
    %p52 = por %p50, %p51
    %p53 = scmp.ne.s32.totalorder %s45, %s47
    %p54 = scmp.eq.s32.totalorder %s16, 1
    %p55 = por %p53, %p54
    %p56 = scmp.ne.s32.totalorder %s47, %s48
    %p57 = scmp.eq.s32.totalorder %s16, 0
    %p58 = por %p56, %p57
    %p59 = scmp.ne.s32.totalorder %s47, %s48
    %p60 = scmp.eq.s32.totalorder %s17, 1
    %p61 = por %p59, %p60
    %p63 = scmp.ne.s32.totalorder %s48, %s62
    %p64 = scmp.eq.s32.totalorder %s17, 0
    %p65 = por %p63, %p64
    %s67 = sadd.s32 %s66, 1
    %p70 = scmp.eq.s32.totalorder %s11, 1
    %p71 = scmp.ne.s32.totalorder %s66, %s68
    %p72 = scmp.eq.s32.totalorder %s11, 0
    %p73 = por %p71, %p72
    %p74 = scmp.ne.s32.totalorder %s66, %s68
    %p75 = scmp.eq.s32.totalorder %s16, 1
    %p76 = por %p74, %p75
    %p77 = scmp.ne.s32.totalorder %s68, %s69
    %p78 = scmp.eq.s32.totalorder %s16, 0
    %p79 = por %p77, %p78
    %p80 = scmp.ne.s32.totalorder %s68, %s69
    %p81 = scmp.eq.s32.totalorder %s17, 1
    %p82 = por %p80, %p81
    %p84 = scmp.ne.s32.totalorder %s69, %s83
    %p85 = scmp.eq.s32.totalorder %s17, 0
    %p86 = por %p84, %p85
    %s88 = sadd.s32 %s87, 1
    %p91 = scmp.eq.s32.totalorder %s11, 1
    %p92 = scmp.ne.s32.totalorder %s87, %s89
    %p93 = scmp.eq.s32.totalorder %s11, 0
    %p94 = por %p92, %p93
    %p95 = scmp.ne.s32.totalorder %s87, %s89
    %p96 = scmp.eq.s32.totalorder %s16, 1
    %p97 = por %p95, %p96
    %p98 = scmp.ne.s32.totalorder %s89, %s90
    %p99 = scmp.eq.s32.totalorder %s16, 0
    %p100 = por %p98, %p99
    %p101 = scmp.ne.s32.totalorder %s89, %s90
    %p102 = scmp.eq.s32.totalorder %s17, 1
    %p103 = por %p101, %p102
    %p105 = scmp.ne.s32.totalorder %s90, %s104
    %p106 = scmp.eq.s32.totalorder %s17, 0
    %p107 = por %p105, %p106
    %s109 = sadd.s32 %s108, 1
    %p112 = scmp.eq.s32.totalorder %s11, 1
    %p113 = scmp.ne.s32.totalorder %s108, %s110
    %p114 = scmp.eq.s32.totalorder %s11, 0
    %p115 = por %p113, %p114
    %p116 = scmp.ne.s32.totalorder %s108, %s110
    %p117 = scmp.eq.s32.totalorder %s16, 1
    %p118 = por %p116, %p117
    %p119 = scmp.ne.s32.totalorder %s110, %s111
    %p120 = scmp.eq.s32.totalorder %s16, 0
    %p121 = por %p119, %p120
    %p122 = scmp.ne.s32.totalorder %s110, %s111
    %p123 = scmp.eq.s32.totalorder %s17, 1
    %p124 = por %p122, %p123
    %p126 = scmp.ne.s32.totalorder %s111, %s125
    %p127 = scmp.eq.s32.totalorder %s17, 0
    %p128 = por %p126, %p127
    %s129 = ssub.s32 %s11, %s18
    %p130 = scmp.eq.s32.totalorder %s129, 0
    %s132 = sadd.s32 %s131, 1
    %s133 = scalar_select %p130, %s131, %s132
    %p136 = pneg %p130
    %p137 = scmp.eq.s32.totalorder %s11, 1
    %p138 = por %p136, %p137
    %p139 = scmp.ne.s32.totalorder %s131, %s134
    %p140 = scmp.eq.s32.totalorder %s11, 0
    %p141 = por %p139, %p140
    %p142 = scmp.ne.s32.totalorder %s131, %s134
    %p143 = scmp.eq.s32.totalorder %s16, 1
    %p144 = por %p142, %p143
    %p145 = scmp.ne.s32.totalorder %s134, %s135
    %p146 = scmp.eq.s32.totalorder %s16, 0
    %p147 = por %p145, %p146
    %p148 = scmp.ne.s32.totalorder %s134, %s135
    %p149 = scmp.eq.s32.totalorder %s17, 1
    %p150 = por %p148, %p149
    %p152 = scmp.ne.s32.totalorder %s135, %s151
    %p153 = scmp.eq.s32.totalorder %s17, 0
    %p154 = por %p152, %p153
    %p155 = scmp.le.s32.totalorder 1, %s11
    %p156 = scmp.lt.s32.totalorder %s11, 3
    %p157 = pnand %p155, %p156
    %p158 = pneg %p157
    // Predicated region
    $region9: #{tpu_custom_call.1} parent=5 // pred_check
      _
    $region10: #{tpu_custom_call.1} parent=5 // pred_check_branch
      %160 = sbr.rel (%p157) target = $region12
    $region11: #{tpu_custom_call.1} parent=5 // pred_region
      %s161 = ssub.s32 %s11, 1
      // Predicated region
      $region13: #{tpu_custom_call.1} parent=11 // pred_check
        %p162 = pneg %p58
      $region14: #{tpu_custom_call.1} parent=11 // pred_check_branch
        %164 = sbr.rel (%p162) target = $region16
      $region15: #{tpu_custom_call.1} parent=11 // pred_region
        _
      $region16: #{tpu_custom_call.1} parent=11 // pred_fallthru
        _
      // Predicated region
      $region17: #{tpu_custom_call.1} parent=11 // pred_check
        %p165 = pneg %p79
      $region18: #{tpu_custom_call.1} parent=11 // pred_check_branch
        %167 = sbr.rel (%p165) target = $region20
      $region19: #{tpu_custom_call.1} parent=11 // pred_region
        _
      $region20: #{tpu_custom_call.1} parent=11 // pred_fallthru
        _
      // Predicated region
      $region21: #{tpu_custom_call.1} parent=11 // pred_check
        %p168 = pneg %p100
      $region22: #{tpu_custom_call.1} parent=11 // pred_check_branch
        %170 = sbr.rel (%p168) target = $region24
      $region23: #{tpu_custom_call.1} parent=11 // pred_region
        _
      $region24: #{tpu_custom_call.1} parent=11 // pred_fallthru
        _
      // Predicated region
      $region25: #{tpu_custom_call.1} parent=11 // pred_check
        %p171 = pneg %p121
      $region26: #{tpu_custom_call.1} parent=11 // pred_check_branch
        %173 = sbr.rel (%p171) target = $region28
      $region27: #{tpu_custom_call.1} parent=11 // pred_region
        _
      $region28: #{tpu_custom_call.1} parent=11 // pred_fallthru
        _
    $region12: #{tpu_custom_call.1} parent=5 // pred_fallthru
      _
    %p174 = scmp.lt.s32.totalorder %s11, 2
    // Predicated region
    $region29: #{tpu_custom_call.1} parent=5 // pred_check
      %p175 = pneg %p174
    $region30: #{tpu_custom_call.1} parent=5 // pred_check_branch
      %177 = sbr.rel (%p175) target = $region32
    $region31: #{tpu_custom_call.1} parent=5 // pred_region
      // Predicated region
      $region33: #{tpu_custom_call.1} parent=31 // pred_check
        %p178 = pneg %p31
      $region34: #{tpu_custom_call.1} parent=31 // pred_check_branch
        %180 = sbr.rel (%p178) target = $region36
      $region35: #{tpu_custom_call.1} parent=31 // pred_region
        %p181 = scmp.lt.s32.totalorder %s11, 1
        %s182 = scalar_select %p181, %s11, 1
        %s183 = smul.addr %s182, 32
        %s184 = smul.addr %s183, 4
        %s185 = scalar_lea.vmem %s0, %s184
      $region36: #{tpu_custom_call.1} parent=31 // pred_fallthru
        _
    $region32: #{tpu_custom_call.1} parent=5 // pred_fallthru
      _
    %p186 = scmp.le.s32.totalorder 1, %s11
    %p187 = scmp.lt.s32.totalorder %s11, 3
    %p188 = pnand %p186, %p187
    %p189 = pneg %p188
    // Predicated region
    $region37: #{tpu_custom_call.1} parent=5 // pred_check
      _
    $region38: #{tpu_custom_call.1} parent=5 // pred_check_branch
      %191 = sbr.rel (%p188) target = $region40
    $region39: #{tpu_custom_call.1} parent=5 // pred_region
      %s192 = ssub.s32 %s11, 1
      %p193 = scmp.lt.s32.totalorder %s16, 1
      %s194 = scalar_select %p193, %s16, 1
      %s195 = smul.addr %s194, 32
      %s196 = smul.addr %s195, 4
      %s197 = scalar_lea.vmem %s0, %s196
      %p198 = pneg %p37
      %p199 = pneg %p34
      %p200 = pneg %p58
      %p201 = pneg %p55
      %p202 = pneg %p79
      %p203 = pneg %p76
      %p204 = pneg %p100
      %p205 = pneg %p97
      %p206 = pneg %p121
      %p207 = pneg %p118
      %p208 = pneg %p147
      %p209 = pneg %p144
      %p210 = scmp.lt.s32.totalorder %s16, 1
      %s211 = scalar_select %p210, %s16, 1
      %s212 = smul.addr %s211, 16
      %s213 = smul.addr %s212, 8
      %s214 = scalar_lea.vmem %s5, %s213
      %p215 = scmp.lt.s32.totalorder %s16, 1
      %s216 = scalar_select %p215, %s16, 1
      %s217 = smul.addr %s216, 32
      %s218 = smul.addr %s217, 4
      %s219 = scalar_lea.vmem %s0, %s218
      %p220 = scmp.lt.s32.totalorder %s16, 1
      %s221 = scalar_select %p220, %s16, 1
      %s222 = smul.addr %s221, 16
      %s223 = smul.addr %s222, 8
      %s224 = scalar_lea.vmem %s5, %s223
      %v226 = vld [vmem:[%s219] sm:$0xff]
      %v227 = vld [vmem:[%s219 + $0x8] sm:$0xff]
      %v228 = vld [vmem:[%s219 + $0x10] sm:$0xff]
      %v229 = vld [vmem:[%s219 + $0x18] sm:$0xff]
      %v230 = vld [vmem:[%s219 + $0x20] sm:$0xff]
      %v231 = vld [vmem:[%s219 + $0x28] sm:$0xff]
      %v232 = vld [vmem:[%s219 + $0x30] sm:$0xff]
      %v233 = vld [vmem:[%s219 + $0x38] sm:$0xff]
      %v234 = vld [vmem:[%s219 + $0x40] sm:$0xff]
      %v235 = vld [vmem:[%s219 + $0x48] sm:$0xff]
      %v236 = vld [vmem:[%s219 + $0x50] sm:$0xff]
      %v237 = vld [vmem:[%s219 + $0x58] sm:$0xff]
      %v238 = vld [vmem:[%s219 + $0x60] sm:$0xff]
      %v239 = vld [vmem:[%s219 + $0x68] sm:$0xff]
      %v240 = vld [vmem:[%s219 + $0x70] sm:$0xff]
      %v241 = vld [vmem:[%s219 + $0x78] sm:$0xff]
      %v242 = vld [vmem:[%s1] sm:$0xf]
      %v243 = vld [vmem:[%s1 + $0x4] sm:$0xf]
      %v244 = vld [vmem:[%s1 + $0x8] sm:$0xf]
      %v245 = vld [vmem:[%s1 + $0xc] sm:$0xf]
      %v246 = vld [vmem:[%s1 + $0x10] sm:$0xf]
      %v247 = vld [vmem:[%s1 + $0x14] sm:$0xf]
      %v248 = vld [vmem:[%s1 + $0x18] sm:$0xf]
      %v249 = vld [vmem:[%s1 + $0x1c] sm:$0xf]
      %v250 = vld [vmem:[%s1 + $0x20] sm:$0xf]
      %v251 = vld [vmem:[%s1 + $0x24] sm:$0xf]
      %v252 = vld [vmem:[%s1 + $0x28] sm:$0xf]
      %v253 = vld [vmem:[%s1 + $0x2c] sm:$0xf]
      %v254 = vld [vmem:[%s1 + $0x30] sm:$0xf]
      %v255 = vld [vmem:[%s1 + $0x34] sm:$0xf]
      %v256 = vld [vmem:[%s1 + $0x38] sm:$0xf]
      %v257 = vld [vmem:[%s1 + $0x3c] sm:$0xf]
      %v258 = vld [vmem:[%s1 + $0x40] sm:$0xf]
      %v259 = vld [vmem:[%s1 + $0x44] sm:$0xf]
      %v260 = vld [vmem:[%s1 + $0x48] sm:$0xf]
      %v261 = vld [vmem:[%s1 + $0x4c] sm:$0xf]
      %v262 = vld [vmem:[%s1 + $0x50] sm:$0xf]
      %v263 = vld [vmem:[%s1 + $0x54] sm:$0xf]
      %v264 = vld [vmem:[%s1 + $0x58] sm:$0xf]
      %v265 = vld [vmem:[%s1 + $0x5c] sm:$0xf]
      %v266 = vld [vmem:[%s1 + $0x60] sm:$0xf]
      %v267 = vld [vmem:[%s1 + $0x64] sm:$0xf]
      %v268 = vld [vmem:[%s1 + $0x68] sm:$0xf]
      %v269 = vld [vmem:[%s1 + $0x6c] sm:$0xf]
      %v270 = vld [vmem:[%s1 + $0x70] sm:$0xf]
      %v271 = vld [vmem:[%s1 + $0x74] sm:$0xf]
      %v272 = vld [vmem:[%s1 + $0x78] sm:$0xf]
      %v273 = vld [vmem:[%s1 + $0x7c] sm:$0xf]
      %v274 = vld [vmem:[%s2] sm:$0x1]
      %v276 = vlaneseq
      %v277 = vshrl.u32 %v276, 7
      %v278 = vsub.s32 0, %v277
      %v279 = vrot.slane %v274, %v278
      %v297 = vunpack.c.l.b16 %v226
      %v298 = vunpack.c.h.b16 %v226
      %v299 = vunpack.c.l.b16 %v227
      %v300 = vunpack.c.h.b16 %v227
      %v301 = vunpack.c.l.b16 %v228
      %v302 = vunpack.c.h.b16 %v228
      %v303 = vunpack.c.l.b16 %v229
      %v304 = vunpack.c.h.b16 %v229
      %v305 = vunpack.c.l.b16 %v230
      %v306 = vunpack.c.h.b16 %v230
      %v307 = vunpack.c.l.b16 %v231
      %v308 = vunpack.c.h.b16 %v231
      %v309 = vunpack.c.l.b16 %v232
      %v310 = vunpack.c.h.b16 %v232
      %v311 = vunpack.c.l.b16 %v233
      %v312 = vunpack.c.h.b16 %v233
      %v313 = vunpack.c.l.b16 %v234
      %v314 = vunpack.c.h.b16 %v234
      %v315 = vunpack.c.l.b16 %v235
      %v316 = vunpack.c.h.b16 %v235
      %v317 = vunpack.c.l.b16 %v236
      %v318 = vunpack.c.h.b16 %v236
      %v319 = vunpack.c.l.b16 %v237
      %v320 = vunpack.c.h.b16 %v237
      %v321 = vunpack.c.l.b16 %v238
      %v322 = vunpack.c.h.b16 %v238
      %v323 = vunpack.c.l.b16 %v239
      %v324 = vunpack.c.h.b16 %v239
      %v325 = vunpack.c.l.b16 %v240
      %v326 = vunpack.c.h.b16 %v240
      %v327 = vunpack.c.l.b16 %v241
      %v328 = vunpack.c.h.b16 %v241
      %v329 = vpack.c.b16 %v299, %v297
      %v330 = vpack.c.b16 %v300, %v298
      %v331 = vpack.c.b16 %v303, %v301
      %v332 = vpack.c.b16 %v304, %v302
      %v333 = vpack.c.b16 %v307, %v305
      %v334 = vpack.c.b16 %v308, %v306
      %v335 = vpack.c.b16 %v311, %v309
      %v336 = vpack.c.b16 %v312, %v310
      %v337 = vpack.c.b16 %v315, %v313
      %v338 = vpack.c.b16 %v316, %v314
      %v339 = vpack.c.b16 %v319, %v317
      %v340 = vpack.c.b16 %v320, %v318
      %v341 = vpack.c.b16 %v323, %v321
      %v342 = vpack.c.b16 %v324, %v322
      %v343 = vpack.c.b16 %v327, %v325
      %v344 = vpack.c.b16 %v328, %v326
      %v393 = vunpack.c.l.b16 %v242
      %v394 = vunpack.c.l.b16 %v243
      %v395 = vunpack.c.l.b16 %v244
      %v396 = vunpack.c.l.b16 %v245
      %v397 = vunpack.c.l.b16 %v246
      %v398 = vunpack.c.l.b16 %v247
      %v399 = vunpack.c.l.b16 %v248
      %v400 = vunpack.c.l.b16 %v249
      %v401 = vunpack.c.l.b16 %v250
      %v402 = vunpack.c.l.b16 %v251
      %v403 = vunpack.c.l.b16 %v252
      %v404 = vunpack.c.l.b16 %v253
      %v405 = vunpack.c.l.b16 %v254
      %v406 = vunpack.c.l.b16 %v255
      %v407 = vunpack.c.l.b16 %v256
      %v408 = vunpack.c.l.b16 %v257
      %v409 = vunpack.c.l.b16 %v258
      %v410 = vunpack.c.l.b16 %v259
      %v411 = vunpack.c.l.b16 %v260
      %v412 = vunpack.c.l.b16 %v261
      %v413 = vunpack.c.l.b16 %v262
      %v414 = vunpack.c.l.b16 %v263
      %v415 = vunpack.c.l.b16 %v264
      %v416 = vunpack.c.l.b16 %v265
      %v417 = vunpack.c.l.b16 %v266
      %v418 = vunpack.c.l.b16 %v267
      %v419 = vunpack.c.l.b16 %v268
      %v420 = vunpack.c.l.b16 %v269
      %v421 = vunpack.c.l.b16 %v270
      %v422 = vunpack.c.l.b16 %v271
      %v423 = vunpack.c.l.b16 %v272
      %v424 = vunpack.c.l.b16 %v273
      %v425 = vpack.c.b16 %v394, %v393
      %v426 = vpack.c.b16 %v396, %v395
      %v427 = vpack.c.b16 %v398, %v397
      %v428 = vpack.c.b16 %v400, %v399
      %v429 = vpack.c.b16 %v402, %v401
      %v430 = vpack.c.b16 %v404, %v403
      %v431 = vpack.c.b16 %v406, %v405
      %v432 = vpack.c.b16 %v408, %v407
      %v433 = vpack.c.b16 %v410, %v409
      %v434 = vpack.c.b16 %v412, %v411
      %v435 = vpack.c.b16 %v414, %v413
      %v436 = vpack.c.b16 %v416, %v415
      %v437 = vpack.c.b16 %v418, %v417
      %v438 = vpack.c.b16 %v420, %v419
      %v439 = vpack.c.b16 %v422, %v421
      %v440 = vpack.c.b16 %v424, %v423
      %457 = vmatprep.subr.bf16.mxu0 0
      %458 = vmatpush1.bf16.msra.mxu0 %v432
      %459 = vmatprep.subr.bf16.mxu0 0
      %460 = vmatpush1.bf16.msra.mxu0 %v431
      %461 = vmatprep.subr.bf16.mxu0 0
      %462 = vmatpush1.bf16.msra.mxu0 %v430
      %463 = vmatprep.subr.bf16.mxu0 0
      %464 = vmatpush1.bf16.msra.mxu0 %v429
      %465 = vmatprep.subr.bf16.mxu0 0
      %466 = vmatpush1.bf16.msra.mxu0 %v428
      %467 = vmatprep.subr.bf16.mxu0 0
      %468 = vmatpush1.bf16.msra.mxu0 %v427
      %469 = vmatprep.subr.bf16.mxu0 0
      %470 = vmatpush1.bf16.msra.mxu0 %v426
      %471 = vmatprep.subr.bf16.mxu0 0
      %472 = vmatpush1.bf16.msra.mxu0 %v425
      %473 = vmatprep.subr.bf16.mxu0 0
      %474 = vmatpush2.bf16.msra.mxu0 %v440
      %475 = vmatprep.subr.bf16.mxu0 0
      %476 = vmatpush2.bf16.msra.mxu0 %v439
      %477 = vmatprep.subr.bf16.mxu0 0
      %478 = vmatpush2.bf16.msra.mxu0 %v438
      %479 = vmatprep.subr.bf16.mxu0 0
      %480 = vmatpush2.bf16.msra.mxu0 %v437
      %481 = vmatprep.subr.bf16.mxu0 0
      %482 = vmatpush2.bf16.msra.mxu0 %v436
      %483 = vmatprep.subr.bf16.mxu0 0
      %484 = vmatpush2.bf16.msra.mxu0 %v435
      %485 = vmatprep.subr.bf16.mxu0 0
      %486 = vmatpush2.bf16.msra.mxu0 %v434
      %487 = vmatprep.subr.bf16.mxu0 0
      %488 = vmatpush2.bf16.msra.mxu0 %v433
      %489 = vmatprep.mubr.bf16.mxu0 %v330
      %490 = vmatmul.mubr.bf16.gmra.mxu0 %v329
      %v491 = vpop.f32.mrf.mxu0
      %v492 = vadd.f32 %v279, %v491
      %v493 = vpop.f32.mrf.mxu0
      %v494 = vpop.f32.mrf.mxu0
      %v495 = vadd.f32 %v279, %v494
      %v496 = vpop.f32.mrf.mxu0
      %497 = vmatprep.mubr.bf16.mxu0 %v332
      %498 = vmatmul.mubr.bf16.gmra.mxu0 %v331
      %v499 = vpop.f32.mrf.mxu0
      %v500 = vadd.f32 %v279, %v499
      %v501 = vpop.f32.mrf.mxu0
      %v502 = vpop.f32.mrf.mxu0
      %v503 = vadd.f32 %v279, %v502
      %v504 = vpop.f32.mrf.mxu0
      %505 = vmatprep.mubr.bf16.mxu0 %v334
      %506 = vmatmul.mubr.bf16.gmra.mxu0 %v333
      %v507 = vpop.f32.mrf.mxu0
      %v508 = vadd.f32 %v279, %v507
      %v509 = vpop.f32.mrf.mxu0
      %v510 = vpop.f32.mrf.mxu0
      %v511 = vadd.f32 %v279, %v510
      %v512 = vpop.f32.mrf.mxu0
      %513 = vmatprep.mubr.bf16.mxu0 %v336
      %514 = vmatmul.mubr.bf16.gmra.mxu0 %v335
      %v515 = vpop.f32.mrf.mxu0
      %v516 = vadd.f32 %v279, %v515
      %v517 = vpop.f32.mrf.mxu0
      %v518 = vpop.f32.mrf.mxu0
      %v519 = vadd.f32 %v279, %v518
      %v520 = vpop.f32.mrf.mxu0
      %521 = vmatprep.mubr.bf16.mxu0 %v338
      %522 = vmatmul.mubr.bf16.gmra.mxu0 %v337
      %v523 = vpop.f32.mrf.mxu0
      %v524 = vadd.f32 %v279, %v523
      %v525 = vpop.f32.mrf.mxu0
      %v526 = vpop.f32.mrf.mxu0
      %v527 = vadd.f32 %v279, %v526
      %v528 = vpop.f32.mrf.mxu0
      %529 = vmatprep.mubr.bf16.mxu0 %v340
      %530 = vmatmul.mubr.bf16.gmra.mxu0 %v339
      %v531 = vpop.f32.mrf.mxu0
      %v532 = vadd.f32 %v279, %v531
      %v533 = vpop.f32.mrf.mxu0
      %v534 = vpop.f32.mrf.mxu0
      %v535 = vadd.f32 %v279, %v534
      %v536 = vpop.f32.mrf.mxu0
      %537 = vmatprep.mubr.bf16.mxu0 %v342
      %538 = vmatmul.mubr.bf16.gmra.mxu0 %v341
      %v539 = vpop.f32.mrf.mxu0
      %v540 = vadd.f32 %v279, %v539
      %v541 = vpop.f32.mrf.mxu0
      %v542 = vpop.f32.mrf.mxu0
      %v543 = vadd.f32 %v279, %v542
      %v544 = vpop.f32.mrf.mxu0
      %545 = vmatprep.mubr.bf16.mxu0 %v344
      %546 = vmatmul.mubr.bf16.gmra.mxu0 %v343
      %v547 = vpop.f32.mrf.mxu0
      %v548 = vadd.f32 %v279, %v547
      %v549 = vpop.f32.mrf.mxu0
      %v550 = vpop.f32.mrf.mxu0
      %v551 = vadd.f32 %v279, %v550
      %v552 = vpop.f32.mrf.mxu0
      %553 = vdwg.mxu0
      %v554 = vlaneseq
      %v555 = vshrl.u32 %v554, 7
      %v556 = vadd.s32 %v555, 8
      %v557 = vadd.s32 %v555, 16
      %v558 = vadd.s32 %v555, 24
      %v559 = vadd.s32 %v555, 32
      %v560 = vadd.s32 %v555, 40
      %v561 = vadd.s32 %v555, 48
      %v562 = vadd.s32 %v555, 56
      %v563 = vadd.s32 %v555, 64
      %v564 = vadd.s32 %v555, 72
      %v565 = vadd.s32 %v555, 80
      %v566 = vadd.s32 %v555, 88
      %v567 = vadd.s32 %v555, 96
      %v568 = vadd.s32 %v555, 104
      %v569 = vadd.s32 %v555, 112
      %v570 = vadd.s32 %v555, 120
      %vm571 = vcmp.eq.s32.totalorder %v555, 0
      %vm572 = vcmp.eq.s32.totalorder %v556, 0
      %vm573 = vcmp.eq.s32.totalorder %v557, 0
      %vm574 = vcmp.eq.s32.totalorder %v558, 0
      %vm575 = vcmp.eq.s32.totalorder %v559, 0
      %vm576 = vcmp.eq.s32.totalorder %v560, 0
      %vm577 = vcmp.eq.s32.totalorder %v561, 0
      %vm578 = vcmp.eq.s32.totalorder %v562, 0
      %vm579 = vcmp.eq.s32.totalorder %v563, 0
      %vm580 = vcmp.eq.s32.totalorder %v564, 0
      %vm581 = vcmp.eq.s32.totalorder %v565, 0
      %vm582 = vcmp.eq.s32.totalorder %v566, 0
      %vm583 = vcmp.eq.s32.totalorder %v567, 0
      %vm584 = vcmp.eq.s32.totalorder %v568, 0
      %vm585 = vcmp.eq.s32.totalorder %v569, 0
      %vm586 = vcmp.eq.s32.totalorder %v570, 0
      %v587 = vld [vmem:[%s3] sm:$0x1]
      %v588 = vsel %vm571, 1, 0
      %v589 = vsel %vm572, 1, 0
      %v590 = vsel %vm573, 1, 0
      %v591 = vsel %vm574, 1, 0
      %v592 = vsel %vm575, 1, 0
      %v593 = vsel %vm576, 1, 0
      %v594 = vsel %vm577, 1, 0
      %v595 = vsel %vm578, 1, 0
      %v596 = vsel %vm579, 1, 0
      %v597 = vsel %vm580, 1, 0
      %v598 = vsel %vm581, 1, 0
      %v599 = vsel %vm582, 1, 0
      %v600 = vsel %vm583, 1, 0
      %v601 = vsel %vm584, 1, 0
      %v602 = vsel %vm585, 1, 0
      %v603 = vsel %vm586, 1, 0
      %vm604 = vcmp.eq.s32.totalorder %v588, 1
      %vm605 = vcmp.eq.s32.totalorder %v589, 1
      %vm606 = vcmp.eq.s32.totalorder %v590, 1
      %vm607 = vcmp.eq.s32.totalorder %v591, 1
      %vm608 = vcmp.eq.s32.totalorder %v592, 1
      %vm609 = vcmp.eq.s32.totalorder %v593, 1
      %vm610 = vcmp.eq.s32.totalorder %v594, 1
      %vm611 = vcmp.eq.s32.totalorder %v595, 1
      %vm612 = vcmp.eq.s32.totalorder %v596, 1
      %vm613 = vcmp.eq.s32.totalorder %v597, 1
      %vm614 = vcmp.eq.s32.totalorder %v598, 1
      %vm615 = vcmp.eq.s32.totalorder %v599, 1
      %vm616 = vcmp.eq.s32.totalorder %v600, 1
      %vm617 = vcmp.eq.s32.totalorder %v601, 1
      %vm618 = vcmp.eq.s32.totalorder %v602, 1
      %vm619 = vcmp.eq.s32.totalorder %v603, 1
      %v621 = vlaneseq
      %v622 = vshrl.u32 %v621, 7
      %v623 = vsub.s32 0, %v622
      %v624 = vrot.slane %v587, %v623
      %v626 = vsel %vm604, %v624, %v492
      %v627 = vsel %vm605, %v624, %v495
      %v628 = vsel %vm606, %v624, %v500
      %v629 = vsel %vm607, %v624, %v503
      %v630 = vsel %vm608, %v624, %v508
      %v631 = vsel %vm609, %v624, %v511
      %v632 = vsel %vm610, %v624, %v516
      %v633 = vsel %vm611, %v624, %v519
      %v634 = vsel %vm612, %v624, %v524
      %v635 = vsel %vm613, %v624, %v527
      %v636 = vsel %vm614, %v624, %v532
      %v637 = vsel %vm615, %v624, %v535
      %v638 = vsel %vm616, %v624, %v540
      %v639 = vsel %vm617, %v624, %v543
      %v640 = vsel %vm618, %v624, %v548
      %v641 = vsel %vm619, %v624, %v551
      %v642 = vld [vmem:[%s4] sm:$0xff]
      %v643 = vld [vmem:[%s4 + $0x8] sm:$0xff]
      %v644 = vld [vmem:[%s4 + $0x10] sm:$0xff]
      %v645 = vld [vmem:[%s4 + $0x18] sm:$0xff]
      %v646 = vld [vmem:[%s4 + $0x20] sm:$0xff]
      %v647 = vld [vmem:[%s4 + $0x28] sm:$0xff]
      %v648 = vld [vmem:[%s4 + $0x30] sm:$0xff]
      %v649 = vld [vmem:[%s4 + $0x38] sm:$0xff]
      %v650 = vld [vmem:[%s4 + $0x40] sm:$0xff]
      %v651 = vld [vmem:[%s4 + $0x48] sm:$0xff]
      %v652 = vld [vmem:[%s4 + $0x50] sm:$0xff]
      %v653 = vld [vmem:[%s4 + $0x58] sm:$0xff]
      %v654 = vld [vmem:[%s4 + $0x60] sm:$0xff]
      %v655 = vld [vmem:[%s4 + $0x68] sm:$0xff]
      %v656 = vld [vmem:[%s4 + $0x70] sm:$0xff]
      %v657 = vld [vmem:[%s4 + $0x78] sm:$0xff]
      %v658 = vadd.f32 %v626, %v642
      %v659 = vadd.f32 %v627, %v643
      %v660 = vadd.f32 %v628, %v644
      %v661 = vadd.f32 %v629, %v645
      %v662 = vadd.f32 %v630, %v646
      %v663 = vadd.f32 %v631, %v647
      %v664 = vadd.f32 %v632, %v648
      %v665 = vadd.f32 %v633, %v649
      %v666 = vadd.f32 %v634, %v650
      %v667 = vadd.f32 %v635, %v651
      %v668 = vadd.f32 %v636, %v652
      %v669 = vadd.f32 %v637, %v653
      %v670 = vadd.f32 %v638, %v654
      %v671 = vadd.f32 %v639, %v655
      %v672 = vadd.f32 %v640, %v656
      %v673 = vadd.f32 %v641, %v657
      %vm674 = vcmask 261120
      %675 = vst.msk [vmem:[%s224] sm:$0xff] %vm674, %v658
      %676 = vst.msk [vmem:[%s224 + $0x8] sm:$0xff] %vm674, %v659
      %677 = vst.msk [vmem:[%s224 + $0x10] sm:$0xff] %vm674, %v660
      %678 = vst.msk [vmem:[%s224 + $0x18] sm:$0xff] %vm674, %v661
      %679 = vst.msk [vmem:[%s224 + $0x20] sm:$0xff] %vm674, %v662
      %680 = vst.msk [vmem:[%s224 + $0x28] sm:$0xff] %vm674, %v663
      %681 = vst.msk [vmem:[%s224 + $0x30] sm:$0xff] %vm674, %v664
      %682 = vst.msk [vmem:[%s224 + $0x38] sm:$0xff] %vm674, %v665
      %683 = vst.msk [vmem:[%s224 + $0x40] sm:$0xff] %vm674, %v666
      %684 = vst.msk [vmem:[%s224 + $0x48] sm:$0xff] %vm674, %v667
      %685 = vst.msk [vmem:[%s224 + $0x50] sm:$0xff] %vm674, %v668
      %686 = vst.msk [vmem:[%s224 + $0x58] sm:$0xff] %vm674, %v669
      %687 = vst.msk [vmem:[%s224 + $0x60] sm:$0xff] %vm674, %v670
      %688 = vst.msk [vmem:[%s224 + $0x68] sm:$0xff] %vm674, %v671
      %689 = vst.msk [vmem:[%s224 + $0x70] sm:$0xff] %vm674, %v672
      %690 = vst.msk [vmem:[%s224 + $0x78] sm:$0xff] %vm674, %v673
      %p691 = scmp.lt.s32.totalorder %s16, 1
      %s692 = scalar_select %p691, %s16, 1
      %s693 = smul.addr %s692, 16
      %s694 = smul.addr %s693, 8
      %s695 = scalar_lea.vmem %s5, %s694
      // Predicated region
      $region41: #{tpu_custom_call.1} parent=39 // pred_check
        %p696 = pneg %p144
      $region42: #{tpu_custom_call.1} parent=39 // pred_check_branch
        %698 = sbr.rel (%p696) target = $region44
      $region43: #{tpu_custom_call.1} parent=39 // pred_region
        _
      $region44: #{tpu_custom_call.1} parent=39 // pred_fallthru
        _
    $region40: #{tpu_custom_call.1} parent=5 // pred_fallthru
      _
    %p699 = scmp.le.s32.totalorder 2, %s11
    // Predicated region
    $region45: #{tpu_custom_call.1} parent=5 // pred_check
      %p700 = pneg %p699
    $region46: #{tpu_custom_call.1} parent=5 // pred_check_branch
      %702 = sbr.rel (%p700) target = $region48
    $region47: #{tpu_custom_call.1} parent=5 // pred_region
      %s703 = ssub.s32 %s11, 2
      // Predicated region
      $region49: #{tpu_custom_call.1} parent=47 // pred_check
        %p704 = pneg %p150
      $region50: #{tpu_custom_call.1} parent=47 // pred_check_branch
        %706 = sbr.rel (%p704) target = $region52
      $region51: #{tpu_custom_call.1} parent=47 // pred_region
        %p707 = scmp.lt.s32.totalorder %s17, 1
        %s708 = scalar_select %p707, %s17, 1
        %s709 = smul.addr %s708, 16
        %s710 = smul.addr %s709, 8
        %s711 = scalar_lea.vmem %s5, %s710
      $region52: #{tpu_custom_call.1} parent=47 // pred_fallthru
        _
    $region48: #{tpu_custom_call.1} parent=5 // pred_fallthru
      _
  $region6: #{tpu_custom_call.1} parent=0 // loop_footer
    %s15 = sadd.s32 1, %s11
  $region7: #{tpu_custom_call.1} parent=0 // loop_footer_branch
    %10 = sbr.rel target = $region3
  $region8: #{tpu_custom_call.1} parent=0 // loop_exit
    _

</llo_original>
